<compile_context>
chip_gen: v7x
topology: tpu7x:2x2x1
jax: 0.10.0
libtpu: 0.0.40
codegen_flags: <defaults>
</compile_context>

<pallas_src>
import jax
import jax.numpy as jnp
from jax.experimental import pallas as pl
from jax.experimental.pallas import tpu as pltpu

LANE = 128  # TPU lane width; feature dims are padded to this for dense stores.


def _round_up(n: int, m: int) -> int:
    return ((n + m - 1) // m) * m


def dqn_kernel(x_ref, w1_ref, b1_ref, w2_ref, b2_ref, w3_ref, b3_ref, o_ref):
    """One batch tile of the 3-layer MLP, fully fused in VMEM."""
    x = x_ref[...].astype(jnp.float32)          # mirrors x.float() in PyTorch
    mm_dtype = w1_ref.dtype                     # f32 or bf16 matmul operands

    # Layer 1: (TILE_B, obs) @ (obs, Hp) -> f32 accumulate, bias/ReLU in f32.
    h1 = jnp.dot(x.astype(mm_dtype), w1_ref[...],
                 preferred_element_type=jnp.float32) + b1_ref[...]
    h1 = jnp.maximum(h1, 0.0)

    # Layer 2: (TILE_B, Hp) @ (Hp, Hp)
    h2 = jnp.dot(h1.astype(mm_dtype), w2_ref[...],
                 preferred_element_type=jnp.float32) + b2_ref[...]
    h2 = jnp.maximum(h2, 0.0)

    # Layer 3: (TILE_B, Hp) @ (Hp, OUTp) — lane-dense (OUTp = 128) output store.
    out = jnp.dot(h2.astype(mm_dtype), w3_ref[...],
                  preferred_element_type=jnp.float32) + b3_ref[...]
    o_ref[...] = out.astype(o_ref.dtype)


def init_params(key, obs_size, hidden_size, n_actions):
    """Mimics PyTorch nn.Linear's uniform(-1/sqrt(fan_in), +1/sqrt(fan_in)) init.

    Weights are stored already-transposed as (in_features, out_features) so the
    kernel computes y = x @ W + b. Biases are (1, out_features).
    """
    def linear(k, fan_in, fan_out):
        kw, kb = jax.random.split(k)
        bound = 1.0 / jnp.sqrt(jnp.float32(fan_in))
        w = jax.random.uniform(kw, (fan_in, fan_out), jnp.float32, -bound, bound)
        b = jax.random.uniform(kb, (1, fan_out), jnp.float32, -bound, bound)
        return w, b

    k1, k2, k3 = jax.random.split(key, 3)
    w1, b1 = linear(k1, obs_size, hidden_size)
    w2, b2 = linear(k2, hidden_size, hidden_size)
    w3, b3 = linear(k3, hidden_size, n_actions)
    return dict(w1=w1, b1=b1, w2=w2, b2=b2, w3=w3, b3=b3)


def prepare_params(params, use_bf16=False):
    """Zero-pad hidden / output feature dims to the 128-lane width and
    optionally cast weights to bf16 (biases stay f32).

    Zero padding is an exact no-op for Linear+ReLU chains, so semantics of the
    original module are preserved bit-for-bit in the f32 path.
    """
    w1, b1, w2, b2, w3, b3 = (params[k] for k in ("w1", "b1", "w2", "b2", "w3", "b3"))
    obs, hidden = w1.shape
    n_actions = w3.shape[1]
    hp = _round_up(hidden, LANE)
    op = _round_up(n_actions, LANE)

    w1p = jnp.zeros((obs, hp), jnp.float32).at[:, :hidden].set(w1)
    b1p = jnp.zeros((1, hp), jnp.float32).at[:, :hidden].set(b1)
    w2p = jnp.zeros((hp, hp), jnp.float32).at[:hidden, :hidden].set(w2)
    b2p = jnp.zeros((1, hp), jnp.float32).at[:, :hidden].set(b2)
    w3p = jnp.zeros((hp, op), jnp.float32).at[:hidden, :n_actions].set(w3)
    b3p = jnp.zeros((1, op), jnp.float32).at[:, :n_actions].set(b3)

    if use_bf16:  # v6e/v7x: bf16 MXU operands, f32 accumulation / bias / ReLU.
        w1p, w2p, w3p = (w.astype(jnp.bfloat16) for w in (w1p, w2p, w3p))

    prepared = dict(w1=w1p, b1=b1p, w2=w2p, b2=b2p, w3=w3p, b3=b3p)
    return prepared, n_actions


def dqn_forward(x, prepared, n_actions, tile_b=512):
    """x: (B, obs_size). prepared: output of prepare_params. Returns (B, n_actions) f32."""
    w1, b1, w2, b2, w3, b3 = (prepared[k] for k in ("w1", "b1", "w2", "b2", "w3", "b3"))
    x = x.astype(jnp.float32)                   # mirrors x.float()
    B, obs = x.shape
    hp = w2.shape[0]
    out_pad = w3.shape[1]

    # Batch tiling: big tiles amortize the ~0.35 us/step grid overhead; clamp
    # for small batches (tile_b stays a multiple of 8 = sublane height) and pad
    # the batch to a tile multiple. Padded rows compute garbage that is sliced
    # off; they never alias real rows.
    tile_b = max(8, min(int(tile_b), _round_up(B, 8)))
    tile_b = _round_up(tile_b, 8)
    b_pad = _round_up(B, tile_b)
    if b_pad != B:
        x = jnp.pad(x, ((0, b_pad - B), (0, 0)))
    grid = (b_pad // tile_b,)

    # Weights/biases: constant index_map -> DMA'd once, VMEM-resident across steps.
    const = lambda a: pl.BlockSpec(a.shape, lambda i: (0, 0))

    # Advisory cost hint for XLA scheduling around the custom call.
    flops = 2 * b_pad * (obs * hp + hp * hp + hp * out_pad)
    bytes_accessed = (
        x.size * 4 + b_pad * out_pad * 4
        + sum(int(a.size) * a.dtype.itemsize for a in (w1, b1, w2, b2, w3, b3))
    )
    cost = pl.CostEstimate(flops=flops, transcendentals=0,
                           bytes_accessed=bytes_accessed)

    out = pl.pallas_call(
        dqn_kernel,
        out_shape=jax.ShapeDtypeStruct((b_pad, out_pad), jnp.float32),
        grid_spec=pltpu.PrefetchScalarGridSpec(
            num_scalar_prefetch=0,
            grid=grid,
            in_specs=[
                pl.BlockSpec((tile_b, obs), lambda i: (i, 0)),   # x tile
                const(w1), const(b1),
                const(w2), const(b2),
                const(w3), const(b3),
            ],
            out_specs=pl.BlockSpec((tile_b, out_pad), lambda i: (i, 0)),
        ),
        compiler_params=pltpu.CompilerParams(
            # Batch axis is embarrassingly parallel -> shard across v7x's 2 TCs.
            dimension_semantics=("parallel",),
        ),
        cost_estimate=cost,
    )(x, w1, b1, w2, b2, w3, b3)

    return out[:B, :n_actions]


def reference_forward(x, params):
    """Pure-JAX reference matching the PyTorch module exactly (f32)."""
    x = x.astype(jnp.float32)
    h1 = jnp.maximum(x @ params["w1"] + params["b1"], 0.0)
    h2 = jnp.maximum(h1 @ params["w2"] + params["b2"], 0.0)
    return h2 @ params["w3"] + params["b3"]


if __name__ == "__main__":
    # LunarLander-v2: obs_size=8, n_actions=4; hidden=32 as in the DQN config.
    obs_size, hidden_size, n_actions = 8, 32, 4

    key = jax.random.PRNGKey(0)
    kx, kp = jax.random.split(key)
    params = init_params(kp, obs_size, hidden_size, n_actions)
    ref_fn = jax.jit(reference_forward)

    # Case 1: small single-env batch, f32 weights -> exact-parity check.
    x_small = jax.random.normal(kx, (8, obs_size), jnp.float32)
    prep_f32, na = prepare_params(params, use_bf16=False)
    out_small = jax.block_until_ready(dqn_forward(x_small, prep_f32, na, tile_b=128))
    ref_small = ref_fn(x_small, params)
    assert out_small.shape == (8, n_actions)
    assert jnp.allclose(out_small, ref_small, atol=1e-5, rtol=1e-5)

    # Case 2: batched eval with a multi-step grid (256 rows, TILE_B=128 -> 2 steps),
    # plus a non-tile-multiple batch (200 rows) to exercise batch padding.
    x_big = jax.random.normal(jax.random.PRNGKey(1), (256, obs_size), jnp.float32)
    out_big = jax.block_until_ready(dqn_forward(x_big, prep_f32, na, tile_b=128))
    assert out_big.shape == (256, n_actions)
    assert jnp.allclose(out_big, ref_fn(x_big, params), atol=1e-5, rtol=1e-5)

    x_odd = jax.random.normal(jax.random.PRNGKey(2), (200, obs_size), jnp.float32)
    out_odd = jax.block_until_ready(dqn_forward(x_odd, prep_f32, na, tile_b=128))
    assert out_odd.shape == (200, n_actions)
    assert jnp.allclose(out_odd, ref_fn(x_odd, params), atol=1e-5, rtol=1e-5)

    # Case 3: bf16 matmul operands (v6e/v7x path), f32 accumulation — loose tolerance.
    prep_bf16, na = prepare_params(params, use_bf16=True)
    out_bf16 = jax.block_until_ready(dqn_forward(x_big, prep_bf16, na, tile_b=128))
    assert out_bf16.shape == (256, n_actions)
    assert jnp.allclose(out_bf16, ref_fn(x_big, params), atol=2e-2, rtol=2e-2)

    print("KERNEL_OK")
</pallas_src>

<mosaic_0001>
module attributes {stable_mosaic.version = 11 : i64} {
  func.func @dqn_kernel(%arg0: i32, %arg1: memref<8x8xf32, #tpu.memory_space<vmem>>, %arg2: memref<8x128xf32, #tpu.memory_space<vmem>>, %arg3: memref<1x128xf32, #tpu.memory_space<vmem>>, %arg4: memref<128x128xf32, #tpu.memory_space<vmem>>, %arg5: memref<1x128xf32, #tpu.memory_space<vmem>>, %arg6: memref<128x128xf32, #tpu.memory_space<vmem>>, %arg7: memref<1x128xf32, #tpu.memory_space<vmem>>, %arg8: memref<8x128xf32, #tpu.memory_space<vmem>>) attributes {dimension_semantics = [#tpu.dimension_semantics<parallel>], iteration_bounds = array<i64: 1>, scalar_prefetch = 0 : i64, scratch_operands = 0 : i64, tpu.core_type = #tpu.core_type<tc>, window_params = [{transform_indices = @transform_0, window_bounds = array<i64: 8, 8>}, {pipeline_mode = #tpu.pipeline_mode<synchronous>, transform_indices = @transform_1, window_bounds = array<i64: 8, 128>}, {pipeline_mode = #tpu.pipeline_mode<synchronous>, transform_indices = @transform_2, window_bounds = array<i64: 1, 128>}, {pipeline_mode = #tpu.pipeline_mode<synchronous>, transform_indices = @transform_3, window_bounds = array<i64: 128, 128>}, {pipeline_mode = #tpu.pipeline_mode<synchronous>, transform_indices = @transform_4, window_bounds = array<i64: 1, 128>}, {pipeline_mode = #tpu.pipeline_mode<synchronous>, transform_indices = @transform_5, window_bounds = array<i64: 128, 128>}, {pipeline_mode = #tpu.pipeline_mode<synchronous>, transform_indices = @transform_6, window_bounds = array<i64: 1, 128>}, {transform_indices = @transform_7, window_bounds = array<i64: 8, 128>}]} {
    %c0 = arith.constant 0 : index
    %c0_0 = arith.constant 0 : index
    %0 = vector.load %arg1[%c0, %c0_0] : memref<8x8xf32, #tpu.memory_space<vmem>>, vector<8x8xf32>
    %c0_1 = arith.constant 0 : index
    %c0_2 = arith.constant 0 : index
    %1 = vector.load %arg2[%c0_1, %c0_2] : memref<8x128xf32, #tpu.memory_space<vmem>>, vector<8x128xf32>
    %cst = arith.constant dense<0.000000e+00> : vector<8x128xf32>
    %2 = tpu.matmul %0, %1, %cst {dimension_numbers = #tpu.dot_dimension_numbers<[1], [0], [0], [1], [0, 0, 1, 1], [], []>} : vector<8x8xf32>, vector<8x128xf32>, vector<8x128xf32> -> vector<8x128xf32>
    %c0_3 = arith.constant 0 : index
    %c0_4 = arith.constant 0 : index
    %3 = vector.load %arg3[%c0_3, %c0_4] : memref<1x128xf32, #tpu.memory_space<vmem>>, vector<1x128xf32>
    %4 = vector.broadcast %3 : vector<1x128xf32> to vector<8x128xf32>
    %5 = arith.addf %2, %4 : vector<8x128xf32>
    %cst_5 = arith.constant 0.000000e+00 : f32
    %6 = vector.broadcast %cst_5 : f32 to vector<8x128xf32>
    %7 = arith.maximumf %5, %6 : vector<8x128xf32>
    %c0_6 = arith.constant 0 : index
    %c0_7 = arith.constant 0 : index
    %8 = vector.load %arg4[%c0_6, %c0_7] : memref<128x128xf32, #tpu.memory_space<vmem>>, vector<128x128xf32>
    %cst_8 = arith.constant dense<0.000000e+00> : vector<8x128xf32>
    %9 = tpu.matmul %7, %8, %cst_8 {dimension_numbers = #tpu.dot_dimension_numbers<[1], [0], [0], [1], [0, 0, 1, 1], [], []>} : vector<8x128xf32>, vector<128x128xf32>, vector<8x128xf32> -> vector<8x128xf32>
    %c0_9 = arith.constant 0 : index
    %c0_10 = arith.constant 0 : index
    %10 = vector.load %arg5[%c0_9, %c0_10] : memref<1x128xf32, #tpu.memory_space<vmem>>, vector<1x128xf32>
    %11 = vector.broadcast %10 : vector<1x128xf32> to vector<8x128xf32>
    %12 = arith.addf %9, %11 : vector<8x128xf32>
    %cst_11 = arith.constant 0.000000e+00 : f32
    %13 = vector.broadcast %cst_11 : f32 to vector<8x128xf32>
    %14 = arith.maximumf %12, %13 : vector<8x128xf32>
    %c0_12 = arith.constant 0 : index
    %c0_13 = arith.constant 0 : index
    %15 = vector.load %arg6[%c0_12, %c0_13] : memref<128x128xf32, #tpu.memory_space<vmem>>, vector<128x128xf32>
    %cst_14 = arith.constant dense<0.000000e+00> : vector<8x128xf32>
    %16 = tpu.matmul %14, %15, %cst_14 {dimension_numbers = #tpu.dot_dimension_numbers<[1], [0], [0], [1], [0, 0, 1, 1], [], []>} : vector<8x128xf32>, vector<128x128xf32>, vector<8x128xf32> -> vector<8x128xf32>
    %c0_15 = arith.constant 0 : index
    %c0_16 = arith.constant 0 : index
    %17 = vector.load %arg7[%c0_15, %c0_16] : memref<1x128xf32, #tpu.memory_space<vmem>>, vector<1x128xf32>
    %18 = vector.broadcast %17 : vector<1x128xf32> to vector<8x128xf32>
    %19 = arith.addf %16, %18 : vector<8x128xf32>
    %c0_17 = arith.constant 0 : index
    %c0_18 = arith.constant 0 : index
    %20 = vector.load %arg8[%c0_17, %c0_18] : memref<8x128xf32, #tpu.memory_space<vmem>>, vector<8x128xf32>
    tpu.vector_store %arg8[%c0_17, %c0_18], %19 {strides = array<i32>} : memref<8x128xf32, #tpu.memory_space<vmem>>, vector<8x128xf32>,
    return
  }
  func.func @transform_0(%arg0: i32) -> (i32, i32) {
    %c0_i32 = arith.constant 0 : i32
    %c0_i32_0 = arith.constant 0 : i32
    return %arg0, %c0_i32 : i32, i32
  }
  func.func @transform_1(%arg0: i32) -> (i32, i32) {
    %c0_i32 = arith.constant 0 : i32
    %c0_i32_0 = arith.constant 0 : i32
    %c0_i32_1 = arith.constant 0 : i32
    return %c0_i32, %c0_i32_0 : i32, i32
  }
  func.func @transform_2(%arg0: i32) -> (i32, i32) {
    %c0_i32 = arith.constant 0 : i32
    %c0_i32_0 = arith.constant 0 : i32
    %c0_i32_1 = arith.constant 0 : i32
    return %c0_i32, %c0_i32_0 : i32, i32
  }
  func.func @transform_3(%arg0: i32) -> (i32, i32) {
    %c0_i32 = arith.constant 0 : i32
    %c0_i32_0 = arith.constant 0 : i32
    %c0_i32_1 = arith.constant 0 : i32
    return %c0_i32, %c0_i32_0 : i32, i32
  }
  func.func @transform_4(%arg0: i32) -> (i32, i32) {
    %c0_i32 = arith.constant 0 : i32
    %c0_i32_0 = arith.constant 0 : i32
    %c0_i32_1 = arith.constant 0 : i32
    return %c0_i32, %c0_i32_0 : i32, i32
  }
  func.func @transform_5(%arg0: i32) -> (i32, i32) {
    %c0_i32 = arith.constant 0 : i32
    %c0_i32_0 = arith.constant 0 : i32
    %c0_i32_1 = arith.constant 0 : i32
    return %c0_i32, %c0_i32_0 : i32, i32
  }
  func.func @transform_6(%arg0: i32) -> (i32, i32) {
    %c0_i32 = arith.constant 0 : i32
    %c0_i32_0 = arith.constant 0 : i32
    %c0_i32_1 = arith.constant 0 : i32
    return %c0_i32, %c0_i32_0 : i32, i32
  }
  func.func @transform_7(%arg0: i32) -> (i32, i32) {
    %c0_i32 = arith.constant 0 : i32
    %c0_i32_0 = arith.constant 0 : i32
    return %arg0, %c0_i32 : i32, i32
  }
}

</mosaic_0001>

<llo_original>
// kernel: tpu_custom_call.1
$region0: #{tpu_custom_call.1}
  #allocation0 [shape = 'u32[]', space=smem, size = 0x4, offset = 0x4, fixed_abs, tag = 'smem constant byte address 0x4 - core index']
  #allocation1 [shape = 'u32[144,128]{1,0:T(1,128)}', space=vmem, size = 0x12000, scoped, tag = 'internal scratch']
  %s0 = inlined_call_operand.hbm [shape: f32[8,8], index: 0, kind: input, shape index: {}]
  %s1 = inlined_call_operand.hbm [shape: f32[8,128], index: 1, kind: input, shape index: {}]
  %s2 = inlined_call_operand.vmem [shape: f32[1,128], index: 2, kind: input, shape index: {}]
  %s3 = inlined_call_operand.hbm [shape: f32[128,128], index: 3, kind: input, shape index: {}]
  %s4 = inlined_call_operand.vmem [shape: f32[1,128], index: 4, kind: input, shape index: {}]
  %s5 = inlined_call_operand.hbm [shape: f32[128,128], index: 5, kind: input, shape index: {}]
  %s6 = inlined_call_operand.vmem [shape: f32[1,128], index: 6, kind: input, shape index: {}]
  %s7 = inlined_call_operand.hbm [shape: f32[8,128], index: 7, kind: output, shape index: {}]
  %s8 = sld [smem:[#allocation0]]
  $region54: #{tpu_custom_call.1} parent=0
    _
  %s10 = ssub.s32 1, %s8
  %s11 = scalar_select 0, %s10, %s8
  $region1: #{tpu_custom_call.1} parent=0
    #allocation2 [shape = 'u8[4096]{0}', space=vmem, size = 0x1000, scoped, tag = 'input window, operand 0, single buffered']
    #allocation3 [shape = 's32[1]{0}', space=sflag, size = 0x4, scoped, tag = 'scoped memory for tpu_custom_call.1']
    #allocation4 [shape = 's32[1]{0}', space=sflag, size = 0x4, scoped, tag = 'scoped memory for tpu_custom_call.1']
    #allocation5 [shape = 'u8[4096]{0}', space=vmem, size = 0x1000, scoped, tag = 'input window, operand 1, single buffered']
    #allocation6 [shape = 's32[1]{0}', space=sflag, size = 0x4, scoped, tag = 'scoped memory for tpu_custom_call.1']
    #allocation7 [shape = 'u8[65536]{0}', space=vmem, size = 0x10000, scoped, tag = 'input window, operand 3, single buffered']
    #allocation8 [shape = 'u8[65536]{0}', space=vmem, size = 0x10000, scoped, tag = 'input window, operand 5, single buffered']
    #allocation9 [shape = 's32[1]{0}', space=sflag, size = 0x4, scoped, tag = 'scoped memory for tpu_custom_call.1']
    #allocation10 [shape = 'u8[4096]{0}', space=vmem, size = 0x1000, scoped, tag = 'output window, operand 0, single buffered']
    %12 = vsyncpa [#allocation3], 0
    %13 = vsyncpa [#allocation6], 0
    %14 = vsyncpa [#allocation9], 0
    %15 = vsyncpa [#allocation4], 0
    // Predicated region
    $region2: #{tpu_custom_call.1} parent=1 // pred_check
      _
    $region3: #{tpu_custom_call.1} parent=1 // pred_check_branch
      %17 = sbr.rel (0) target = $region5
    $region4: #{tpu_custom_call.1} parent=1 // pred_region
      %s19 = ssub.s32 128, 128
      %20 = vsyncadd [#allocation3], %s19
      %s22 = sshll.u32 [#allocation2], 4
      %s23 = int_to_ptr.vmem [resolvable:$true] %s22
      %25 = dma.hbm_to_vmem [thread:$0]  %s0, 128, %s23, [#allocation3]
    $region5: #{tpu_custom_call.1} parent=1 // pred_fallthru
      _
    // Predicated region
    $region6: #{tpu_custom_call.1} parent=1 // pred_check
      _
    $region7: #{tpu_custom_call.1} parent=1 // pred_check_branch
      %27 = sbr.rel (0) target = $region9
    $region8: #{tpu_custom_call.1} parent=1 // pred_region
      %s29 = ssub.s32 128, 128
      %30 = vsyncadd [#allocation6], %s29
      %s32 = sshll.u32 [#allocation5], 4
      %s33 = int_to_ptr.vmem [resolvable:$true] %s32
      %35 = dma.hbm_to_vmem [thread:$0]  %s1, 128, %s33, [#allocation6]
    $region9: #{tpu_custom_call.1} parent=1 // pred_fallthru
      _
    // Predicated region
    $region10: #{tpu_custom_call.1} parent=1 // pred_check
      _
    $region11: #{tpu_custom_call.1} parent=1 // pred_check_branch
      %37 = sbr.rel (0) target = $region13
    $region12: #{tpu_custom_call.1} parent=1 // pred_region
      _
    $region13: #{tpu_custom_call.1} parent=1 // pred_fallthru
      _
    // Predicated region
    $region14: #{tpu_custom_call.1} parent=1 // pred_check
      _
    $region15: #{tpu_custom_call.1} parent=1 // pred_check_branch
      %39 = sbr.rel (0) target = $region17
    $region16: #{tpu_custom_call.1} parent=1 // pred_region
      %s41 = ssub.s32 2048, 2048
      %42 = vsyncadd [#allocation6], %s41
      %s43 = sshll.u32 [#allocation7], 4
      %s44 = int_to_ptr.vmem [resolvable:$true] %s43
      %49 = dma.hbm_to_vmem [thread:$0]  %s3, 2048, %s44, [#allocation6], 128, 128, 8
    $region17: #{tpu_custom_call.1} parent=1 // pred_fallthru
      _
    // Predicated region
    $region18: #{tpu_custom_call.1} parent=1 // pred_check
      _
    $region19: #{tpu_custom_call.1} parent=1 // pred_check_branch
      %51 = sbr.rel (0) target = $region21
    $region20: #{tpu_custom_call.1} parent=1 // pred_region
      _
    $region21: #{tpu_custom_call.1} parent=1 // pred_fallthru
      _
    // Predicated region
    $region22: #{tpu_custom_call.1} parent=1 // pred_check
      _
    $region23: #{tpu_custom_call.1} parent=1 // pred_check_branch
      %53 = sbr.rel (0) target = $region25
    $region24: #{tpu_custom_call.1} parent=1 // pred_region
      %s55 = ssub.s32 2048, 2048
      %56 = vsyncadd [#allocation9], %s55
      %s57 = sshll.u32 [#allocation8], 4
      %s58 = int_to_ptr.vmem [resolvable:$true] %s57
      %63 = dma.hbm_to_vmem [thread:$0]  %s5, 2048, %s58, [#allocation9], 128, 128, 8
    $region25: #{tpu_custom_call.1} parent=1 // pred_fallthru
      _
    // Predicated region
    $region26: #{tpu_custom_call.1} parent=1 // pred_check
      _
    $region27: #{tpu_custom_call.1} parent=1 // pred_check_branch
      %65 = sbr.rel (0) target = $region29
    $region28: #{tpu_custom_call.1} parent=1 // pred_region
      _
    $region29: #{tpu_custom_call.1} parent=1 // pred_fallthru
      _
    // Predicated region
    $region30: #{tpu_custom_call.1} parent=1 // pred_check
      _
    $region31: #{tpu_custom_call.1} parent=1 // pred_check_branch
      %67 = sbr.rel (0) target = $region33
    $region32: #{tpu_custom_call.1} parent=1 // pred_region
      %68 = dma.done [#allocation3], 128
    $region33: #{tpu_custom_call.1} parent=1 // pred_fallthru
      _
    // Predicated region
    $region34: #{tpu_custom_call.1} parent=1 // pred_check
      _
    $region35: #{tpu_custom_call.1} parent=1 // pred_check_branch
      %70 = sbr.rel (0) target = $region37
    $region36: #{tpu_custom_call.1} parent=1 // pred_region
      %71 = dma.done [#allocation6], 128
    $region37: #{tpu_custom_call.1} parent=1 // pred_fallthru
      _
    // Predicated region
    $region38: #{tpu_custom_call.1} parent=1 // pred_check
      _
    $region39: #{tpu_custom_call.1} parent=1 // pred_check_branch
      %73 = sbr.rel (0) target = $region41
    $region40: #{tpu_custom_call.1} parent=1 // pred_region
      %74 = dma.done [#allocation6], 2048
    $region41: #{tpu_custom_call.1} parent=1 // pred_fallthru
      _
    // Predicated region
    $region42: #{tpu_custom_call.1} parent=1 // pred_check
      _
    $region43: #{tpu_custom_call.1} parent=1 // pred_check_branch
      %76 = sbr.rel (0) target = $region45
    $region44: #{tpu_custom_call.1} parent=1 // pred_region
      %77 = dma.done [#allocation9], 2048
    $region45: #{tpu_custom_call.1} parent=1 // pred_fallthru
      _
    %v78 = vld [vmem:[#allocation2] sm:$0xff]
    %v79 = vld [vmem:[#allocation5] sm:$0xff]
    %v80 = vld [vmem:[%s2] sm:$0x1]
    %v82 = vlaneseq
    %v83 = vshrl.u32 %v82, 7
    %v84 = vsub.s32 0, %v83
    %v85 = vrot.slane %v80, %v84
    %vm87 = vcmask 64512
    %v89 = vsel %vm87, %v78, 0
    %91 = vmatprep.subr.mxu0 0.0
    %92 = vmatpush1.msra.mxu0 %v79
    %93 = vmatprep.subr.mxu0 0.0
    %94 = vmatpush1.msra.mxu0 0.0
    %95 = vmatprep.subr.mxu0 0.0
    %96 = vmatpush1.msra.mxu0 0.0
    %97 = vmatprep.subr.mxu0 0.0
    %98 = vmatpush1.msra.mxu0 0.0
    %99 = vmatprep.subr.mxu0 0.0
    %100 = vmatpush1.msra.mxu0 0.0
    %101 = vmatprep.subr.mxu0 0.0
    %102 = vmatpush1.msra.mxu0 0.0
    %103 = vmatprep.subr.mxu0 0.0
    %104 = vmatpush1.msra.mxu0 0.0
    %105 = vmatprep.subr.mxu0 0.0
    %106 = vmatpush1.msra.mxu0 0.0
    %107 = vmatprep.subr.mxu0 0.0
    %108 = vmatpush1.msra.mxu0 0.0
    %109 = vmatprep.subr.mxu0 0.0
    %110 = vmatpush1.msra.mxu0 0.0
    %111 = vmatprep.subr.mxu0 0.0
    %112 = vmatpush1.msra.mxu0 0.0
    %113 = vmatprep.subr.mxu0 0.0
    %114 = vmatpush1.msra.mxu0 0.0
    %115 = vmatprep.subr.mxu0 0.0
    %116 = vmatpush1.msra.mxu0 0.0
    %117 = vmatprep.subr.mxu0 0.0
    %118 = vmatpush1.msra.mxu0 0.0
    %119 = vmatprep.subr.mxu0 0.0
    %120 = vmatpush1.msra.mxu0 0.0
    %121 = vmatprep.subr.mxu0 0.0
    %122 = vmatpush1.msra.mxu0 0.0
    %123 = vmatprep.subr.mxu0 0.0
    %124 = vmatpush1.msra.mxu0 0.0
    %125 = vmatprep.subr.mxu0 0.0
    %126 = vmatpush1.msra.mxu0 0.0
    %127 = vmatprep.subr.mxu0 0.0
    %128 = vmatpush1.msra.mxu0 0.0
    %129 = vmatprep.subr.mxu0 0.0
    %130 = vmatpush1.msra.mxu0 0.0
    %131 = vmatprep.subr.mxu0 0.0
    %132 = vmatpush1.msra.mxu0 0.0
    %133 = vmatprep.subr.mxu0 0.0
    %134 = vmatpush1.msra.mxu0 0.0
    %135 = vmatprep.subr.mxu0 0.0
    %136 = vmatpush1.msra.mxu0 0.0
    %137 = vmatprep.subr.mxu0 0.0
    %138 = vmatpush1.msra.mxu0 0.0
    %139 = vmatprep.subr.mxu0 0.0
    %140 = vmatpush1.msra.mxu0 0.0
    %141 = vmatprep.subr.mxu0 0.0
    %142 = vmatpush1.msra.mxu0 0.0
    %143 = vmatprep.subr.mxu0 0.0
    %144 = vmatpush1.msra.mxu0 0.0
    %145 = vmatprep.subr.mxu0 0.0
    %146 = vmatpush1.msra.mxu0 0.0
    %147 = vmatprep.subr.mxu0 0.0
    %148 = vmatpush1.msra.mxu0 0.0
    %149 = vmatprep.subr.mxu0 0.0
    %150 = vmatpush1.msra.mxu0 0.0
    %151 = vmatprep.subr.mxu0 0.0
    %152 = vmatpush1.msra.mxu0 0.0
    %153 = vmatprep.subr.mxu0 0.0
    %154 = vmatpush1.msra.mxu0 0.0
    %155 = vmatprep.mubr.f32.mxu0 0.0
    %156 = vmatmul.mubr.f32.gmra.mrb[0].mxu0 %v89
    %v157 = vpop.f32.mrb[0].mxu0
    %v158 = vadd.f32 %v85, %v157
    %v159 = vpop.f32.mrb[0].mxu0
    %160 = vdwg.mxu0
    %v161 = vmax.f32 %v158, 0.0
    %v162 = vld [vmem:[#allocation7] sm:$0xff]
    %v163 = vld [vmem:[#allocation7 + $0x8] sm:$0xff]
    %v164 = vld [vmem:[#allocation7 + $0x10] sm:$0xff]
    %v165 = vld [vmem:[#allocation7 + $0x18] sm:$0xff]
    %v166 = vld [vmem:[#allocation7 + $0x20] sm:$0xff]
    %v167 = vld [vmem:[#allocation7 + $0x28] sm:$0xff]
    %v168 = vld [vmem:[#allocation7 + $0x30] sm:$0xff]
    %v169 = vld [vmem:[#allocation7 + $0x38] sm:$0xff]
    %v170 = vld [vmem:[#allocation7 + $0x40] sm:$0xff]
    %v171 = vld [vmem:[#allocation7 + $0x48] sm:$0xff]
    %v172 = vld [vmem:[#allocation7 + $0x50] sm:$0xff]
    %v173 = vld [vmem:[#allocation7 + $0x58] sm:$0xff]
    %v174 = vld [vmem:[#allocation7 + $0x60] sm:$0xff]
    %v175 = vld [vmem:[#allocation7 + $0x68] sm:$0xff]
    %v176 = vld [vmem:[#allocation7 + $0x70] sm:$0xff]
    %v177 = vld [vmem:[#allocation7 + $0x78] sm:$0xff]
    %v178 = vld [vmem:[%s4] sm:$0x1]
    %v180 = vlaneseq
    %v181 = vshrl.u32 %v180, 7
    %v182 = vsub.s32 0, %v181
    %v183 = vrot.slane %v178, %v182
    %185 = vmatprep.subr.mxu0 0.0
    %186 = vmatpush1.msra.mxu0 %v162
    %187 = vmatprep.subr.mxu0 0.0
    %188 = vmatpush1.msra.mxu0 %v163
    %189 = vmatprep.subr.mxu0 0.0
    %190 = vmatpush1.msra.mxu0 %v164
    %191 = vmatprep.subr.mxu0 0.0
    %192 = vmatpush1.msra.mxu0 %v165
    %193 = vmatprep.subr.mxu0 0.0
    %194 = vmatpush1.msra.mxu0 %v166
    %195 = vmatprep.subr.mxu0 0.0
    %196 = vmatpush1.msra.mxu0 %v167
    %197 = vmatprep.subr.mxu0 0.0
    %198 = vmatpush1.msra.mxu0 %v168
    %199 = vmatprep.subr.mxu0 0.0
    %200 = vmatpush1.msra.mxu0 %v169
    %201 = vmatprep.subr.mxu0 0.0
    %202 = vmatpush1.msra.mxu0 %v170
    %203 = vmatprep.subr.mxu0 0.0
    %204 = vmatpush1.msra.mxu0 %v171
    %205 = vmatprep.subr.mxu0 0.0
    %206 = vmatpush1.msra.mxu0 %v172
    %207 = vmatprep.subr.mxu0 0.0
    %208 = vmatpush1.msra.mxu0 %v173
    %209 = vmatprep.subr.mxu0 0.0
    %210 = vmatpush1.msra.mxu0 %v174
    %211 = vmatprep.subr.mxu0 0.0
    %212 = vmatpush1.msra.mxu0 %v175
    %213 = vmatprep.subr.mxu0 0.0
    %214 = vmatpush1.msra.mxu0 %v176
    %215 = vmatprep.subr.mxu0 0.0
    %216 = vmatpush1.msra.mxu0 %v177
    %217 = vmatprep.subr.mxu0 0.0
    %218 = vmatpush1.msra.mxu0 0.0
    %219 = vmatprep.subr.mxu0 0.0
    %220 = vmatpush1.msra.mxu0 0.0
    %221 = vmatprep.subr.mxu0 0.0
    %222 = vmatpush1.msra.mxu0 0.0
    %223 = vmatprep.subr.mxu0 0.0
    %224 = vmatpush1.msra.mxu0 0.0
    %225 = vmatprep.subr.mxu0 0.0
    %226 = vmatpush1.msra.mxu0 0.0
    %227 = vmatprep.subr.mxu0 0.0
    %228 = vmatpush1.msra.mxu0 0.0
    %229 = vmatprep.subr.mxu0 0.0
    %230 = vmatpush1.msra.mxu0 0.0
    %231 = vmatprep.subr.mxu0 0.0
    %232 = vmatpush1.msra.mxu0 0.0
    %233 = vmatprep.subr.mxu0 0.0
    %234 = vmatpush1.msra.mxu0 0.0
    %235 = vmatprep.subr.mxu0 0.0
    %236 = vmatpush1.msra.mxu0 0.0
    %237 = vmatprep.subr.mxu0 0.0
    %238 = vmatpush1.msra.mxu0 0.0
    %239 = vmatprep.subr.mxu0 0.0
    %240 = vmatpush1.msra.mxu0 0.0
    %241 = vmatprep.subr.mxu0 0.0
    %242 = vmatpush1.msra.mxu0 0.0
    %243 = vmatprep.subr.mxu0 0.0
    %244 = vmatpush1.msra.mxu0 0.0
    %245 = vmatprep.subr.mxu0 0.0
    %246 = vmatpush1.msra.mxu0 0.0
    %247 = vmatprep.subr.mxu0 0.0
    %248 = vmatpush1.msra.mxu0 0.0
    %249 = vmatprep.mubr.f32.mxu0 0.0
    %250 = vmatmul.mubr.f32.gmra.mrb[0].mxu0 %v161
    %v251 = vpop.f32.mrb[0].mxu0
    %v252 = vadd.f32 %v183, %v251
    %v253 = vpop.f32.mrb[0].mxu0
    %254 = vdwg.mxu0
    %v255 = vmax.f32 %v252, 0.0
    %v256 = vld [vmem:[#allocation8] sm:$0xff]
    %v257 = vld [vmem:[#allocation8 + $0x8] sm:$0xff]
    %v258 = vld [vmem:[#allocation8 + $0x10] sm:$0xff]
    %v259 = vld [vmem:[#allocation8 + $0x18] sm:$0xff]
    %v260 = vld [vmem:[#allocation8 + $0x20] sm:$0xff]
    %v261 = vld [vmem:[#allocation8 + $0x28] sm:$0xff]
    %v262 = vld [vmem:[#allocation8 + $0x30] sm:$0xff]
    %v263 = vld [vmem:[#allocation8 + $0x38] sm:$0xff]
    %v264 = vld [vmem:[#allocation8 + $0x40] sm:$0xff]
    %v265 = vld [vmem:[#allocation8 + $0x48] sm:$0xff]
    %v266 = vld [vmem:[#allocation8 + $0x50] sm:$0xff]
    %v267 = vld [vmem:[#allocation8 + $0x58] sm:$0xff]
    %v268 = vld [vmem:[#allocation8 + $0x60] sm:$0xff]
    %v269 = vld [vmem:[#allocation8 + $0x68] sm:$0xff]
    %v270 = vld [vmem:[#allocation8 + $0x70] sm:$0xff]
    %v271 = vld [vmem:[#allocation8 + $0x78] sm:$0xff]
    %v272 = vld [vmem:[%s6] sm:$0x1]
    %v274 = vlaneseq
    %v275 = vshrl.u32 %v274, 7
    %v276 = vsub.s32 0, %v275
    %v277 = vrot.slane %v272, %v276
    %279 = vmatprep.subr.mxu0 0.0
    %280 = vmatpush1.msra.mxu0 %v256
    %281 = vmatprep.subr.mxu0 0.0
    %282 = vmatpush1.msra.mxu0 %v257
    %283 = vmatprep.subr.mxu0 0.0
    %284 = vmatpush1.msra.mxu0 %v258
    %285 = vmatprep.subr.mxu0 0.0
    %286 = vmatpush1.msra.mxu0 %v259
    %287 = vmatprep.subr.mxu0 0.0
    %288 = vmatpush1.msra.mxu0 %v260
    %289 = vmatprep.subr.mxu0 0.0
    %290 = vmatpush1.msra.mxu0 %v261
    %291 = vmatprep.subr.mxu0 0.0
    %292 = vmatpush1.msra.mxu0 %v262
    %293 = vmatprep.subr.mxu0 0.0
    %294 = vmatpush1.msra.mxu0 %v263
    %295 = vmatprep.subr.mxu0 0.0
    %296 = vmatpush1.msra.mxu0 %v264
    %297 = vmatprep.subr.mxu0 0.0
    %298 = vmatpush1.msra.mxu0 %v265
    %299 = vmatprep.subr.mxu0 0.0
    %300 = vmatpush1.msra.mxu0 %v266
    %301 = vmatprep.subr.mxu0 0.0
    %302 = vmatpush1.msra.mxu0 %v267
    %303 = vmatprep.subr.mxu0 0.0
    %304 = vmatpush1.msra.mxu0 %v268
    %305 = vmatprep.subr.mxu0 0.0
    %306 = vmatpush1.msra.mxu0 %v269
    %307 = vmatprep.subr.mxu0 0.0
    %308 = vmatpush1.msra.mxu0 %v270
    %309 = vmatprep.subr.mxu0 0.0
    %310 = vmatpush1.msra.mxu0 %v271
    %311 = vmatprep.subr.mxu0 0.0
    %312 = vmatpush1.msra.mxu0 0.0
    %313 = vmatprep.subr.mxu0 0.0
    %314 = vmatpush1.msra.mxu0 0.0
    %315 = vmatprep.subr.mxu0 0.0
    %316 = vmatpush1.msra.mxu0 0.0
    %317 = vmatprep.subr.mxu0 0.0
    %318 = vmatpush1.msra.mxu0 0.0
    %319 = vmatprep.subr.mxu0 0.0
    %320 = vmatpush1.msra.mxu0 0.0
    %321 = vmatprep.subr.mxu0 0.0
    %322 = vmatpush1.msra.mxu0 0.0
    %323 = vmatprep.subr.mxu0 0.0
    %324 = vmatpush1.msra.mxu0 0.0
    %325 = vmatprep.subr.mxu0 0.0
    %326 = vmatpush1.msra.mxu0 0.0
    %327 = vmatprep.subr.mxu0 0.0
    %328 = vmatpush1.msra.mxu0 0.0
    %329 = vmatprep.subr.mxu0 0.0
    %330 = vmatpush1.msra.mxu0 0.0
    %331 = vmatprep.subr.mxu0 0.0
    %332 = vmatpush1.msra.mxu0 0.0
    %333 = vmatprep.subr.mxu0 0.0
    %334 = vmatpush1.msra.mxu0 0.0
    %335 = vmatprep.subr.mxu0 0.0
    %336 = vmatpush1.msra.mxu0 0.0
    %337 = vmatprep.subr.mxu0 0.0
    %338 = vmatpush1.msra.mxu0 0.0
    %339 = vmatprep.subr.mxu0 0.0
    %340 = vmatpush1.msra.mxu0 0.0
    %341 = vmatprep.subr.mxu0 0.0
    %342 = vmatpush1.msra.mxu0 0.0
    %343 = vmatprep.mubr.f32.mxu0 0.0
    %344 = vmatmul.mubr.f32.gmra.mrb[0].mxu0 %v255
    %v345 = vpop.f32.mrb[0].mxu0
    %v346 = vadd.f32 %v277, %v345
    %v347 = vpop.f32.mrb[0].mxu0
    %348 = vdwg.mxu0
    %349 = vst [vmem:[#allocation10] sm:$0xff] %v346
    // Predicated region
    $region46: #{tpu_custom_call.1} parent=1 // pred_check
      _
    $region47: #{tpu_custom_call.1} parent=1 // pred_check_branch
      %351 = sbr.rel (0) target = $region49
    $region48: #{tpu_custom_call.1} parent=1 // pred_region
      %s353 = ssub.s32 128, 128
      %354 = vsyncadd [#allocation4], %s353
      %s356 = sshll.u32 [#allocation10], 4
      %s357 = int_to_ptr.vmem [resolvable:$true] %s356
      %359 = dma.vmem_to_hbm [thread:$0]  %s357, 128, %s7, [#allocation4]
    $region49: #{tpu_custom_call.1} parent=1 // pred_fallthru
      _
    // Predicated region
    $region50: #{tpu_custom_call.1} parent=1 // pred_check
      _
    $region51: #{tpu_custom_call.1} parent=1 // pred_check_branch
      %361 = sbr.rel (0) target = $region53
    $region52: #{tpu_custom_call.1} parent=1 // pred_region
      %362 = dma.done [#allocation4], 128
    $region53: #{tpu_custom_call.1} parent=1 // pred_fallthru
      _
    %363 = vsyncpa [#allocation3], 1
    %364 = vsyncpa [#allocation6], 1
    %365 = vsyncpa [#allocation9], 1
    %366 = vsyncpa [#allocation4], 1

</llo_original>
